<compile_context>
chip_gen: v6e
topology: v6e:2x2x1
jax: 0.10.0
libtpu: 0.0.40
codegen_flags: <defaults>
</compile_context>

<pallas_src>
import jax
import jax.numpy as jnp
from jax.experimental import pallas as pl
from jax.experimental.pallas import tpu as pltpu


def _round_up(x, m):
    return ((x + m - 1) // m) * m


def _pad2d(a, rows, cols):
    pr, pc = rows - a.shape[0], cols - a.shape[1]
    if pr == 0 and pc == 0:
        return a
    return jnp.pad(a, ((0, pr), (0, pc)))


def mlp_kernel(x_ref, w1_ref, b1_ref, w2_ref, b2_ref, out_ref, rep_ref):
    # fc1: (bm, Dp) @ (Dp, Hp) -> f32 accumulator; bias-add + ReLU in f32.
    h = jnp.dot(x_ref[...], w1_ref[...], preferred_element_type=jnp.float32)
    h = h + b1_ref[...]                        # (1, Hp) broadcasts over rows (f32)
    rep = jnp.maximum(h, 0.0)
    rep_ref[...] = rep.astype(rep_ref.dtype)

    # fc2: cast activation to the MXU input dtype (bf16 when weights are bf16),
    # accumulate in f32, bias-add in f32, single cast at the store.
    o = jnp.dot(rep.astype(w2_ref.dtype), w2_ref[...],
                preferred_element_type=jnp.float32)
    o = o + b2_ref[...]
    out_ref[...] = o.astype(out_ref.dtype)


def _pick_block_m(B):
    # Aim for MXU-saturating tiles (up to 256 rows) but keep >= 2 grid steps
    # when the batch allows it (so both v7x TensorCores get work); always a
    # multiple of 8 (f32 sublane packing).
    bm = 8 * pl.cdiv(pl.cdiv(B, 2), 8)
    return int(min(256, max(8, bm)))


def mlp_forward(x, w1, b1, w2, b2, *, block_m=None):
    """x: (B, D_in); w1: (D_in, H); b1: (1, H); w2: (H, C); b2: (1, C).

    Returns (out, out_rep) exactly like the PyTorch module's forward.
    """
    B, D_in = x.shape
    H = w1.shape[1]
    C = w2.shape[1]

    if block_m is None:
        block_m = _pick_block_m(B)

    # Lane/sublane-friendly padding: last dims -> multiples of 128, batch ->
    # multiple of block_m.  Zero padding is exact: extra K columns/rows
    # contribute 0, extra output rows/cols are sliced away below.
    Dp = _round_up(D_in, 128)
    Hp = _round_up(H, 128)
    Cp = _round_up(C, 128)
    Bp = _round_up(B, block_m)

    xp = _pad2d(x, Bp, Dp)
    w1p = _pad2d(w1, Dp, Hp)
    b1p = _pad2d(b1.reshape(1, -1), 1, Hp)
    w2p = _pad2d(w2, Hp, Cp)
    b2p = _pad2d(b2.reshape(1, -1), 1, Cp)

    grid = (Bp // block_m,)

    # NOTE: for very large D_in/H (e.g. >= 4096 f32 weights on v7x's 64 MiB
    # VMEM) the resident-weight pattern below should be swapped for a K/N
    # "arbitrary" grid axis with a VMEM f32 accumulator, or bf16 weights
    # (already supported here).
    x_isz = jnp.dtype(xp.dtype).itemsize
    w_isz = jnp.dtype(w1p.dtype).itemsize
    b_isz = jnp.dtype(b1p.dtype).itemsize
    est_vmem = (
        2 * block_m * (Dp + Hp + Cp) * x_isz      # double-buffered x/out/rep tiles
        + 2 * (Dp * Hp + Hp * Cp) * w_isz         # resident weights (double-buffered)
        + 2 * (Hp + Cp) * b_isz                   # biases
        + block_m * (Hp + Cp) * 4                 # f32 accumulators / epilogue temps
    )
    vmem_limit = int(min(48 * 2**20, max(32 * 2**20, 2 * est_vmem)))

    flops = 2 * Bp * Dp * Hp + 2 * Bp * Hp * Cp
    bytes_accessed = (
        xp.size * x_isz
        + (w1p.size + w2p.size) * w_isz
        + (b1p.size + b2p.size) * b_isz
        + Bp * (Hp + Cp) * x_isz
    )

    out_p, rep_p = pl.pallas_call(
        mlp_kernel,
        out_shape=(
            jax.ShapeDtypeStruct((Bp, Cp), x.dtype),   # fc2 output (lane-dense)
            jax.ShapeDtypeStruct((Bp, Hp), x.dtype),   # relu(fc1) output (lane-dense)
        ),
        grid_spec=pltpu.PrefetchScalarGridSpec(
            num_scalar_prefetch=0,
            grid=grid,
            in_specs=[
                pl.BlockSpec((block_m, Dp), lambda i: (i, 0)),  # x tile
                pl.BlockSpec((Dp, Hp), lambda i: (0, 0)),       # W1 (resident)
                pl.BlockSpec((1, Hp), lambda i: (0, 0)),        # b1 (f32)
                pl.BlockSpec((Hp, Cp), lambda i: (0, 0)),       # W2 (resident)
                pl.BlockSpec((1, Cp), lambda i: (0, 0)),        # b2 (f32)
            ],
            out_specs=[
                pl.BlockSpec((block_m, Cp), lambda i: (i, 0)),
                pl.BlockSpec((block_m, Hp), lambda i: (i, 0)),
            ],
        ),
        compiler_params=pltpu.CompilerParams(
            dimension_semantics=("parallel",),
            vmem_limit_bytes=vmem_limit,
        ),
        cost_estimate=pl.CostEstimate(
            flops=flops, transcendentals=0, bytes_accessed=bytes_accessed),
    )(xp, w1p, b1p, w2p, b2p)

    # Strip the padding.
    return out_p[:B, :C], rep_p[:B, :H]


def make_params(key, input_size, hidden_size, num_classes, dtype=jnp.float32):
    """Deterministic synthetic parameters (PyTorch-style uniform init bounds)."""
    k1, k2, k3, k4 = jax.random.split(key, 4)
    bound1 = 1.0 / (input_size ** 0.5)
    bound2 = 1.0 / (hidden_size ** 0.5)
    w1 = jax.random.uniform(k1, (input_size, hidden_size), dtype, -bound1, bound1)
    b1 = jax.random.uniform(k2, (1, hidden_size), dtype, -bound1, bound1)
    w2 = jax.random.uniform(k3, (hidden_size, num_classes), dtype, -bound2, bound2)
    b2 = jax.random.uniform(k4, (1, num_classes), dtype, -bound2, bound2)
    return w1, b1, w2, b2


if __name__ == "__main__":
    # Small shapes consistent with the module's forward.
    batch, input_size, hidden_size, num_classes = 16, 32, 64, 10

    key = jax.random.PRNGKey(0)
    kx, kp = jax.random.split(key)
    x = jax.random.normal(kx, (batch, input_size), dtype=jnp.float32)
    w1, b1, w2, b2 = make_params(kp, input_size, hidden_size, num_classes)

    # --- f32 path: tight check against the pure-JAX reference ---------------
    out, out_rep = mlp_forward(x, w1, b1, w2, b2)
    jax.block_until_ready((out, out_rep))

    rep_ref = jnp.maximum(x @ w1 + b1, 0.0)
    out_ref = rep_ref @ w2 + b2
    assert out.shape == (batch, num_classes) and out_rep.shape == (batch, hidden_size)
    assert jnp.allclose(out, out_ref, atol=1e-5), "fc2 output mismatch (f32)"
    assert jnp.allclose(out_rep, rep_ref, atol=1e-5), "relu(fc1) output mismatch (f32)"

    # --- bf16 path: bf16 MXU inputs, f32 accumulation/epilogue ---------------
    out_b, rep_b = mlp_forward(
        x.astype(jnp.bfloat16),
        w1.astype(jnp.bfloat16), b1,
        w2.astype(jnp.bfloat16), b2,
    )
    jax.block_until_ready((out_b, rep_b))
    assert jnp.allclose(out_b.astype(jnp.float32), out_ref, atol=5e-2, rtol=5e-2), \
        "fc2 output mismatch (bf16)"
    assert jnp.allclose(rep_b.astype(jnp.float32), rep_ref, atol=5e-2, rtol=5e-2), \
        "relu(fc1) output mismatch (bf16)"

    print("KERNEL_OK")
</pallas_src>

<mosaic_0001>
module attributes {stable_mosaic.version = 11 : i64} {
  func.func @mlp_kernel(%arg0: i32, %arg1: memref<8x128xf32, #tpu.memory_space<vmem>>, %arg2: memref<128x128xf32, #tpu.memory_space<vmem>>, %arg3: memref<1x128xf32, #tpu.memory_space<vmem>>, %arg4: memref<128x128xf32, #tpu.memory_space<vmem>>, %arg5: memref<1x128xf32, #tpu.memory_space<vmem>>, %arg6: memref<8x128xf32, #tpu.memory_space<vmem>>, %arg7: memref<8x128xf32, #tpu.memory_space<vmem>>) attributes {dimension_semantics = [#tpu.dimension_semantics<parallel>], iteration_bounds = array<i64: 2>, scalar_prefetch = 0 : i64, scratch_operands = 0 : i64, tpu.core_type = #tpu.core_type<tc>, window_params = [{transform_indices = @transform_0, window_bounds = array<i64: 8, 128>}, {pipeline_mode = #tpu.pipeline_mode<synchronous>, transform_indices = @transform_1, window_bounds = array<i64: 128, 128>}, {pipeline_mode = #tpu.pipeline_mode<synchronous>, transform_indices = @transform_2, window_bounds = array<i64: 1, 128>}, {pipeline_mode = #tpu.pipeline_mode<synchronous>, transform_indices = @transform_3, window_bounds = array<i64: 128, 128>}, {pipeline_mode = #tpu.pipeline_mode<synchronous>, transform_indices = @transform_4, window_bounds = array<i64: 1, 128>}, {transform_indices = @transform_5, window_bounds = array<i64: 8, 128>}, {transform_indices = @transform_6, window_bounds = array<i64: 8, 128>}]} {
    %c0 = arith.constant 0 : index
    %c0_0 = arith.constant 0 : index
    %0 = vector.load %arg1[%c0, %c0_0] : memref<8x128xf32, #tpu.memory_space<vmem>>, vector<8x128xf32>
    %c0_1 = arith.constant 0 : index
    %c0_2 = arith.constant 0 : index
    %1 = vector.load %arg2[%c0_1, %c0_2] : memref<128x128xf32, #tpu.memory_space<vmem>>, vector<128x128xf32>
    %cst = arith.constant dense<0.000000e+00> : vector<8x128xf32>
    %2 = tpu.matmul %0, %1, %cst {dimension_numbers = #tpu.dot_dimension_numbers<[1], [0], [0], [1], [0, 0, 1, 1], [], []>} : vector<8x128xf32>, vector<128x128xf32>, vector<8x128xf32> -> vector<8x128xf32>
    %c0_3 = arith.constant 0 : index
    %c0_4 = arith.constant 0 : index
    %3 = vector.load %arg3[%c0_3, %c0_4] : memref<1x128xf32, #tpu.memory_space<vmem>>, vector<1x128xf32>
    %4 = vector.broadcast %3 : vector<1x128xf32> to vector<8x128xf32>
    %5 = arith.addf %2, %4 : vector<8x128xf32>
    %cst_5 = arith.constant 0.000000e+00 : f32
    %6 = vector.broadcast %cst_5 : f32 to vector<8x128xf32>
    %7 = arith.maximumf %5, %6 : vector<8x128xf32>
    %c0_6 = arith.constant 0 : index
    %c0_7 = arith.constant 0 : index
    %8 = vector.load %arg7[%c0_6, %c0_7] : memref<8x128xf32, #tpu.memory_space<vmem>>, vector<8x128xf32>
    tpu.vector_store %arg7[%c0_6, %c0_7], %7 {strides = array<i32>} : memref<8x128xf32, #tpu.memory_space<vmem>>, vector<8x128xf32>,
    %c0_8 = arith.constant 0 : index
    %c0_9 = arith.constant 0 : index
    %9 = vector.load %arg4[%c0_8, %c0_9] : memref<128x128xf32, #tpu.memory_space<vmem>>, vector<128x128xf32>
    %cst_10 = arith.constant dense<0.000000e+00> : vector<8x128xf32>
    %10 = tpu.matmul %7, %9, %cst_10 {dimension_numbers = #tpu.dot_dimension_numbers<[1], [0], [0], [1], [0, 0, 1, 1], [], []>} : vector<8x128xf32>, vector<128x128xf32>, vector<8x128xf32> -> vector<8x128xf32>
    %c0_11 = arith.constant 0 : index
    %c0_12 = arith.constant 0 : index
    %11 = vector.load %arg5[%c0_11, %c0_12] : memref<1x128xf32, #tpu.memory_space<vmem>>, vector<1x128xf32>
    %12 = vector.broadcast %11 : vector<1x128xf32> to vector<8x128xf32>
    %13 = arith.addf %10, %12 : vector<8x128xf32>
    %c0_13 = arith.constant 0 : index
    %c0_14 = arith.constant 0 : index
    %14 = vector.load %arg6[%c0_13, %c0_14] : memref<8x128xf32, #tpu.memory_space<vmem>>, vector<8x128xf32>
    tpu.vector_store %arg6[%c0_13, %c0_14], %13 {strides = array<i32>} : memref<8x128xf32, #tpu.memory_space<vmem>>, vector<8x128xf32>,
    return
  }
  func.func @transform_0(%arg0: i32) -> (i32, i32) {
    %c0_i32 = arith.constant 0 : i32
    %c0_i32_0 = arith.constant 0 : i32
    return %arg0, %c0_i32 : i32, i32
  }
  func.func @transform_1(%arg0: i32) -> (i32, i32) {
    %c0_i32 = arith.constant 0 : i32
    %c0_i32_0 = arith.constant 0 : i32
    %c0_i32_1 = arith.constant 0 : i32
    return %c0_i32, %c0_i32_0 : i32, i32
  }
  func.func @transform_2(%arg0: i32) -> (i32, i32) {
    %c0_i32 = arith.constant 0 : i32
    %c0_i32_0 = arith.constant 0 : i32
    %c0_i32_1 = arith.constant 0 : i32
    return %c0_i32, %c0_i32_0 : i32, i32
  }
  func.func @transform_3(%arg0: i32) -> (i32, i32) {
    %c0_i32 = arith.constant 0 : i32
    %c0_i32_0 = arith.constant 0 : i32
    %c0_i32_1 = arith.constant 0 : i32
    return %c0_i32, %c0_i32_0 : i32, i32
  }
  func.func @transform_4(%arg0: i32) -> (i32, i32) {
    %c0_i32 = arith.constant 0 : i32
    %c0_i32_0 = arith.constant 0 : i32
    %c0_i32_1 = arith.constant 0 : i32
    return %c0_i32, %c0_i32_0 : i32, i32
  }
  func.func @transform_5(%arg0: i32) -> (i32, i32) {
    %c0_i32 = arith.constant 0 : i32
    %c0_i32_0 = arith.constant 0 : i32
    return %arg0, %c0_i32 : i32, i32
  }
  func.func @transform_6(%arg0: i32) -> (i32, i32) {
    %c0_i32 = arith.constant 0 : i32
    %c0_i32_0 = arith.constant 0 : i32
    return %arg0, %c0_i32 : i32, i32
  }
}

</mosaic_0001>

<llo_original>
// kernel: tpu_custom_call.1
$region0: #{tpu_custom_call.1}
  #allocation0 [shape = 'u32[]', space=smem, size = 0x4, offset = 0x4, fixed_abs, tag = 'smem constant byte address 0x4 - core index']
  #allocation1 [shape = 'u32[144,128]{1,0:T(1,128)}', space=vmem, size = 0x12000, scoped, tag = 'internal scratch']
  %s0 = inlined_call_operand.hbm [shape: f32[16,128], index: 0, kind: input, shape index: {}]
  %s1 = inlined_call_operand.hbm [shape: f32[128,128], index: 1, kind: input, shape index: {}]
  %s2 = inlined_call_operand.vmem [shape: f32[1,128], index: 2, kind: input, shape index: {}]
  %s3 = inlined_call_operand.hbm [shape: f32[128,128], index: 3, kind: input, shape index: {}]
  %s4 = inlined_call_operand.vmem [shape: f32[1,128], index: 4, kind: input, shape index: {}]
  %s5 = inlined_call_operand.hbm [shape: f32[16,128], index: 5, kind: output, shape index: {0}]
  %s6 = inlined_call_operand.hbm [shape: f32[16,128], index: 6, kind: output, shape index: {1}]
  %7 = xla_tuple %s5, %s6
  %s8 = sld [smem:[#allocation0]]
  $region73: #{tpu_custom_call.1} parent=0
    _
  %s10 = ssub.s32 1, %s8
  %s11 = scalar_select 0, %s10, %s8
  $region1: #{tpu_custom_call.1} parent=0
    #allocation2 [shape = 'u8[8192]{0}', space=vmem, size = 0x2000, scoped, tag = 'input window, operand 0']
    #allocation3 [shape = 's32[2]{0}', space=sflag, size = 0x8, scoped, tag = 'scoped memory for tpu_custom_call.1']
    #allocation4 [shape = 's32[2]{0}', space=sflag, size = 0x8, scoped, tag = 'scoped memory for tpu_custom_call.1']
    #allocation5 [shape = 'u8[65536]{0}', space=vmem, size = 0x10000, scoped, tag = 'input window, operand 1, single buffered']
    #allocation6 [shape = 's32[1]{0}', space=sflag, size = 0x4, scoped, tag = 'scoped memory for tpu_custom_call.1']
    #allocation7 [shape = 'u8[65536]{0}', space=vmem, size = 0x10000, scoped, tag = 'input window, operand 3, single buffered']
    #allocation8 [shape = 'u8[8192]{0}', space=vmem, size = 0x2000, scoped, tag = 'output window, operand 0']
    #allocation9 [shape = 'u8[8192]{0}', space=vmem, size = 0x2000, scoped, tag = 'output window, operand 1']
    #allocation10 [shape = 's32[2]{0}', space=sflag, size = 0x8, scoped, tag = 'scoped memory for tpu_custom_call.1']
    %12 = vsyncpa [#allocation3], 0
    %s13 = scalar_lea.sflag [#allocation3], 1
    %14 = vsyncpa %s13, 0
    %15 = vsyncpa [#allocation6], 0
    %16 = vsyncpa [#allocation4], 0
    %s17 = scalar_lea.sflag [#allocation4], 1
    %18 = vsyncpa %s17, 0
    %19 = vsyncpa [#allocation10], 0
    %s20 = scalar_lea.sflag [#allocation10], 1
    %21 = vsyncpa %s20, 0
    loop: start=0, step=1, limit=4
    $region2: #{tpu_custom_call.1} parent=1 // loop_pre_header
      _
    $region3: #{tpu_custom_call.1} parent=1 // loop_header
      %s23 = sphi 0, %s27
      %p24 = scmp.ge.s32.totalorder %s23, 4
      %s33 = sphi 0, %s35
      %s36 = sphi 0, %s33
      %s37 = sphi 0, %s36
      %s53 = sphi 0, %s37
      %s57 = sphi 0, %s57
      %s59 = sphi 0, %s57
      %s60 = sphi 0, %s59
      %s74 = sphi 0, %s60
      %s78 = sphi 0, %s78
      %s80 = sphi 0, %s78
      %s81 = sphi 0, %s80
      %s95 = sphi 0, %s81
      %s99 = sphi 0, %s99
      %s101 = sphi 0, %s99
      %s102 = sphi 0, %s101
      %s116 = sphi 0, %s102
      %s120 = sphi 0, %s120
      %s122 = sphi 0, %s120
      %s123 = sphi 0, %s122
      %s137 = sphi 0, %s123
      %s143 = sphi 0, %s145
      %s146 = sphi 0, %s143
      %s147 = sphi 0, %s146
      %s163 = sphi 0, %s147
      %s169 = sphi 0, %s171
      %s172 = sphi 0, %s169
      %s173 = sphi 0, %s172
      %s189 = sphi 0, %s173
    $region4: #{tpu_custom_call.1} parent=1 // loop_header_branch
      %26 = sbr.rel (%p24) target = $region8
    $region5: #{tpu_custom_call.1} parent=1 // loop_body
      %s28 = ssub.s32 %s23, 1
      %s29 = ssub.s32 %s23, 2
      %s30 = sadd.s32 %s23, 1
      %s31 = ssub.s32 %s23, %s30
      %p32 = scmp.eq.s32.totalorder %s31, 0
      %s34 = sadd.s32 %s33, 1
      %s35 = scalar_select %p32, %s33, %s34
      %p38 = pneg %p32
      %p39 = scmp.eq.s32.totalorder %s23, 1
      %p40 = por %p38, %p39
      %p41 = scmp.ne.s32.totalorder %s33, %s36
      %p42 = scmp.eq.s32.totalorder %s23, 0
      %p43 = por %p41, %p42
      %p44 = scmp.ne.s32.totalorder %s33, %s36
      %p45 = scmp.eq.s32.totalorder %s28, 1
      %p46 = por %p44, %p45
      %p47 = scmp.ne.s32.totalorder %s36, %s37
      %p48 = scmp.eq.s32.totalorder %s28, 0
      %p49 = por %p47, %p48
      %p50 = scmp.ne.s32.totalorder %s36, %s37
      %p51 = scmp.eq.s32.totalorder %s29, 1
      %p52 = por %p50, %p51
      %p54 = scmp.ne.s32.totalorder %s37, %s53
      %p55 = scmp.eq.s32.totalorder %s29, 0
      %p56 = por %p54, %p55
      %s58 = sadd.s32 %s57, 1
      %p61 = scmp.eq.s32.totalorder %s23, 1
      %p62 = scmp.ne.s32.totalorder %s57, %s59
      %p63 = scmp.eq.s32.totalorder %s23, 0
      %p64 = por %p62, %p63
      %p65 = scmp.ne.s32.totalorder %s57, %s59
      %p66 = scmp.eq.s32.totalorder %s28, 1
      %p67 = por %p65, %p66
      %p68 = scmp.ne.s32.totalorder %s59, %s60
      %p69 = scmp.eq.s32.totalorder %s28, 0
      %p70 = por %p68, %p69
      %p71 = scmp.ne.s32.totalorder %s59, %s60
      %p72 = scmp.eq.s32.totalorder %s29, 1
      %p73 = por %p71, %p72
      %p75 = scmp.ne.s32.totalorder %s60, %s74
      %p76 = scmp.eq.s32.totalorder %s29, 0
      %p77 = por %p75, %p76
      %s79 = sadd.s32 %s78, 1
      %p82 = scmp.eq.s32.totalorder %s23, 1
      %p83 = scmp.ne.s32.totalorder %s78, %s80
      %p84 = scmp.eq.s32.totalorder %s23, 0
      %p85 = por %p83, %p84
      %p86 = scmp.ne.s32.totalorder %s78, %s80
      %p87 = scmp.eq.s32.totalorder %s28, 1
      %p88 = por %p86, %p87
      %p89 = scmp.ne.s32.totalorder %s80, %s81
      %p90 = scmp.eq.s32.totalorder %s28, 0
      %p91 = por %p89, %p90
      %p92 = scmp.ne.s32.totalorder %s80, %s81
      %p93 = scmp.eq.s32.totalorder %s29, 1
      %p94 = por %p92, %p93
      %p96 = scmp.ne.s32.totalorder %s81, %s95
      %p97 = scmp.eq.s32.totalorder %s29, 0
      %p98 = por %p96, %p97
      %s100 = sadd.s32 %s99, 1
      %p103 = scmp.eq.s32.totalorder %s23, 1
      %p104 = scmp.ne.s32.totalorder %s99, %s101
      %p105 = scmp.eq.s32.totalorder %s23, 0
      %p106 = por %p104, %p105
      %p107 = scmp.ne.s32.totalorder %s99, %s101
      %p108 = scmp.eq.s32.totalorder %s28, 1
      %p109 = por %p107, %p108
      %p110 = scmp.ne.s32.totalorder %s101, %s102
      %p111 = scmp.eq.s32.totalorder %s28, 0
      %p112 = por %p110, %p111
      %p113 = scmp.ne.s32.totalorder %s101, %s102
      %p114 = scmp.eq.s32.totalorder %s29, 1
      %p115 = por %p113, %p114
      %p117 = scmp.ne.s32.totalorder %s102, %s116
      %p118 = scmp.eq.s32.totalorder %s29, 0
      %p119 = por %p117, %p118
      %s121 = sadd.s32 %s120, 1
      %p124 = scmp.eq.s32.totalorder %s23, 1
      %p125 = scmp.ne.s32.totalorder %s120, %s122
      %p126 = scmp.eq.s32.totalorder %s23, 0
      %p127 = por %p125, %p126
      %p128 = scmp.ne.s32.totalorder %s120, %s122
      %p129 = scmp.eq.s32.totalorder %s28, 1
      %p130 = por %p128, %p129
      %p131 = scmp.ne.s32.totalorder %s122, %s123
      %p132 = scmp.eq.s32.totalorder %s28, 0
      %p133 = por %p131, %p132
      %p134 = scmp.ne.s32.totalorder %s122, %s123
      %p135 = scmp.eq.s32.totalorder %s29, 1
      %p136 = por %p134, %p135
      %p138 = scmp.ne.s32.totalorder %s123, %s137
      %p139 = scmp.eq.s32.totalorder %s29, 0
      %p140 = por %p138, %p139
      %s141 = ssub.s32 %s23, %s30
      %p142 = scmp.eq.s32.totalorder %s141, 0
      %s144 = sadd.s32 %s143, 1
      %s145 = scalar_select %p142, %s143, %s144
      %p148 = pneg %p142
      %p149 = scmp.eq.s32.totalorder %s23, 1
      %p150 = por %p148, %p149
      %p151 = scmp.ne.s32.totalorder %s143, %s146
      %p152 = scmp.eq.s32.totalorder %s23, 0
      %p153 = por %p151, %p152
      %p154 = scmp.ne.s32.totalorder %s143, %s146
      %p155 = scmp.eq.s32.totalorder %s28, 1
      %p156 = por %p154, %p155
      %p157 = scmp.ne.s32.totalorder %s146, %s147
      %p158 = scmp.eq.s32.totalorder %s28, 0
      %p159 = por %p157, %p158
      %p160 = scmp.ne.s32.totalorder %s146, %s147
      %p161 = scmp.eq.s32.totalorder %s29, 1
      %p162 = por %p160, %p161
      %p164 = scmp.ne.s32.totalorder %s147, %s163
      %p165 = scmp.eq.s32.totalorder %s29, 0
      %p166 = por %p164, %p165
      %s167 = ssub.s32 %s23, %s30
      %p168 = scmp.eq.s32.totalorder %s167, 0
      %s170 = sadd.s32 %s169, 1
      %s171 = scalar_select %p168, %s169, %s170
      %p174 = pneg %p168
      %p175 = scmp.eq.s32.totalorder %s23, 1
      %p176 = por %p174, %p175
      %p177 = scmp.ne.s32.totalorder %s169, %s172
      %p178 = scmp.eq.s32.totalorder %s23, 0
      %p179 = por %p177, %p178
      %p180 = scmp.ne.s32.totalorder %s169, %s172
      %p181 = scmp.eq.s32.totalorder %s28, 1
      %p182 = por %p180, %p181
      %p183 = scmp.ne.s32.totalorder %s172, %s173
      %p184 = scmp.eq.s32.totalorder %s28, 0
      %p185 = por %p183, %p184
      %p186 = scmp.ne.s32.totalorder %s172, %s173
      %p187 = scmp.eq.s32.totalorder %s29, 1
      %p188 = por %p186, %p187
      %p190 = scmp.ne.s32.totalorder %s173, %s189
      %p191 = scmp.eq.s32.totalorder %s29, 0
      %p192 = por %p190, %p191
      %p193 = scmp.le.s32.totalorder 1, %s23
      %p194 = scmp.lt.s32.totalorder %s23, 3
      %p195 = pnand %p193, %p194
      %p196 = pneg %p195
      // Predicated region
      $region9: #{tpu_custom_call.1} parent=5 // pred_check
        _
      $region10: #{tpu_custom_call.1} parent=5 // pred_check_branch
        %198 = sbr.rel (%p195) target = $region12
      $region11: #{tpu_custom_call.1} parent=5 // pred_region
        %s199 = ssub.s32 %s23, 1
        // Predicated region
        $region13: #{tpu_custom_call.1} parent=11 // pred_check
          %p200 = pneg %p70
        $region14: #{tpu_custom_call.1} parent=11 // pred_check_branch
          %202 = sbr.rel (%p200) target = $region16
        $region15: #{tpu_custom_call.1} parent=11 // pred_region
          %s204 = ssub.s32 2048, 2048
          %205 = vsyncadd [#allocation6], %s204
          %s206 = sshll.u32 [#allocation5], 4
          %s207 = int_to_ptr.vmem [resolvable:$true] %s206
          %212 = dma.hbm_to_vmem [thread:$0]  %s1, 2048, %s207, [#allocation6], 128, 128, 8
        $region16: #{tpu_custom_call.1} parent=11 // pred_fallthru
          _
        // Predicated region
        $region17: #{tpu_custom_call.1} parent=11 // pred_check
          %p213 = pneg %p91
        $region18: #{tpu_custom_call.1} parent=11 // pred_check_branch
          %215 = sbr.rel (%p213) target = $region20
        $region19: #{tpu_custom_call.1} parent=11 // pred_region
          _
        $region20: #{tpu_custom_call.1} parent=11 // pred_fallthru
          _
        // Predicated region
        $region21: #{tpu_custom_call.1} parent=11 // pred_check
          %p216 = pneg %p112
        $region22: #{tpu_custom_call.1} parent=11 // pred_check_branch
          %218 = sbr.rel (%p216) target = $region24
        $region23: #{tpu_custom_call.1} parent=11 // pred_region
          %s220 = ssub.s32 2048, 2048
          %221 = vsyncadd [#allocation6], %s220
          %s222 = sshll.u32 [#allocation7], 4
          %s223 = int_to_ptr.vmem [resolvable:$true] %s222
          %228 = dma.hbm_to_vmem [thread:$0]  %s3, 2048, %s223, [#allocation6], 128, 128, 8
        $region24: #{tpu_custom_call.1} parent=11 // pred_fallthru
          _
        // Predicated region
        $region25: #{tpu_custom_call.1} parent=11 // pred_check
          %p229 = pneg %p133
        $region26: #{tpu_custom_call.1} parent=11 // pred_check_branch
          %231 = sbr.rel (%p229) target = $region28
        $region27: #{tpu_custom_call.1} parent=11 // pred_region
          _
        $region28: #{tpu_custom_call.1} parent=11 // pred_fallthru
          _
      $region12: #{tpu_custom_call.1} parent=5 // pred_fallthru
        _
      %p232 = scmp.lt.s32.totalorder %s23, 2
      // Predicated region
      $region29: #{tpu_custom_call.1} parent=5 // pred_check
        %p233 = pneg %p232
      $region30: #{tpu_custom_call.1} parent=5 // pred_check_branch
        %235 = sbr.rel (%p233) target = $region32
      $region31: #{tpu_custom_call.1} parent=5 // pred_region
        // Predicated region
        $region33: #{tpu_custom_call.1} parent=31 // pred_check
          %p236 = pneg %p43
        $region34: #{tpu_custom_call.1} parent=31 // pred_check_branch
          %238 = sbr.rel (%p236) target = $region36
        $region35: #{tpu_custom_call.1} parent=31 // pred_region
          %s239 = sand.u32 %s33, 1
          %s240 = scalar_lea.sflag [#allocation3], %s239
          %s241 = sand.u32 %s33, 1
          %s242 = smul.addr %s241, 8
          %s243 = scalar_lea.vmem [#allocation2], %s242
          %s245 = ssub.s32 128, 128
          %246 = vsyncadd %s240, %s245
          %s247 = smul.addr %s23, 128
          %s248 = scalar_lea.hbm %s0, %s247
          %s250 = sshll.u32 %s243, 4
          %s251 = int_to_ptr.vmem [resolvable:$true] %s250
          %253 = dma.hbm_to_vmem [thread:$0]  %s248, 128, %s251, %s240
        $region36: #{tpu_custom_call.1} parent=31 // pred_fallthru
          _
      $region32: #{tpu_custom_call.1} parent=5 // pred_fallthru
        _
      %p254 = scmp.le.s32.totalorder 1, %s23
      %p255 = scmp.lt.s32.totalorder %s23, 3
      %p256 = pnand %p254, %p255
      %p257 = pneg %p256
      // Predicated region
      $region37: #{tpu_custom_call.1} parent=5 // pred_check
        _
      $region38: #{tpu_custom_call.1} parent=5 // pred_check_branch
        %259 = sbr.rel (%p256) target = $region40
      $region39: #{tpu_custom_call.1} parent=5 // pred_region
        %s260 = ssub.s32 %s23, 1
        %s261 = sand.u32 %s36, 1
        %s262 = scalar_lea.sflag [#allocation3], %s261
        %s263 = sand.u32 %s36, 1
        %s264 = smul.addr %s263, 8
        %s265 = scalar_lea.vmem [#allocation2], %s264
        // Predicated region
        $region41: #{tpu_custom_call.1} parent=39 // pred_check
          %p266 = pneg %p49
        $region42: #{tpu_custom_call.1} parent=39 // pred_check_branch
          %268 = sbr.rel (%p266) target = $region44
        $region43: #{tpu_custom_call.1} parent=39 // pred_region
          %269 = dma.done %s262, 128
        $region44: #{tpu_custom_call.1} parent=39 // pred_fallthru
          _
        // Predicated region
        $region45: #{tpu_custom_call.1} parent=39 // pred_check
          %p270 = pneg %p70
        $region46: #{tpu_custom_call.1} parent=39 // pred_check_branch
          %272 = sbr.rel (%p270) target = $region48
        $region47: #{tpu_custom_call.1} parent=39 // pred_region
          %273 = dma.done [#allocation6], 2048
        $region48: #{tpu_custom_call.1} parent=39 // pred_fallthru
          _
        // Predicated region
        $region49: #{tpu_custom_call.1} parent=39 // pred_check
          %p274 = pneg %p112
        $region50: #{tpu_custom_call.1} parent=39 // pred_check_branch
          %276 = sbr.rel (%p274) target = $region52
        $region51: #{tpu_custom_call.1} parent=39 // pred_region
          %277 = dma.done [#allocation6], 2048
        $region52: #{tpu_custom_call.1} parent=39 // pred_fallthru
          _
        %s278 = sand.u32 %s36, 1
        %s279 = scalar_lea.sflag [#allocation3], %s278
        %s280 = sand.u32 %s36, 1
        %s281 = smul.addr %s280, 8
        %s282 = scalar_lea.vmem [#allocation2], %s281
        %p283 = pneg %p49
        %p284 = pneg %p46
        %p285 = pneg %p70
        %p286 = pneg %p67
        %p287 = pneg %p91
        %p288 = pneg %p88
        %p289 = pneg %p112
        %p290 = pneg %p109
        %p291 = pneg %p133
        %p292 = pneg %p130
        %p293 = pneg %p159
        %p294 = pneg %p156
        %s295 = sand.u32 %s146, 1
        %s296 = scalar_lea.sflag [#allocation4], %s295
        %s297 = sand.u32 %s146, 1
        %s298 = smul.addr %s297, 8
        %s299 = scalar_lea.vmem [#allocation8], %s298
        %p300 = pneg %p185
        %p301 = pneg %p182
        %s302 = sand.u32 %s172, 1
        %s303 = scalar_lea.sflag [#allocation10], %s302
        %s304 = sand.u32 %s172, 1
        %s305 = smul.addr %s304, 8
        %s306 = scalar_lea.vmem [#allocation9], %s305
        %v307 = vld [vmem:[%s265] sm:$0xff]
        %v308 = vld [vmem:[#allocation5] sm:$0xff]
        %v309 = vld [vmem:[#allocation5 + $0x8] sm:$0xff]
        %v310 = vld [vmem:[#allocation5 + $0x10] sm:$0xff]
        %v311 = vld [vmem:[#allocation5 + $0x18] sm:$0xff]
        %v312 = vld [vmem:[#allocation5 + $0x20] sm:$0xff]
        %v313 = vld [vmem:[#allocation5 + $0x28] sm:$0xff]
        %v314 = vld [vmem:[#allocation5 + $0x30] sm:$0xff]
        %v315 = vld [vmem:[#allocation5 + $0x38] sm:$0xff]
        %v316 = vld [vmem:[#allocation5 + $0x40] sm:$0xff]
        %v317 = vld [vmem:[#allocation5 + $0x48] sm:$0xff]
        %v318 = vld [vmem:[#allocation5 + $0x50] sm:$0xff]
        %v319 = vld [vmem:[#allocation5 + $0x58] sm:$0xff]
        %v320 = vld [vmem:[#allocation5 + $0x60] sm:$0xff]
        %v321 = vld [vmem:[#allocation5 + $0x68] sm:$0xff]
        %v322 = vld [vmem:[#allocation5 + $0x70] sm:$0xff]
        %v323 = vld [vmem:[#allocation5 + $0x78] sm:$0xff]
        %v324 = vld [vmem:[%s2] sm:$0x1]
        %v326 = vlaneseq
        %v327 = vshrl.u32 %v326, 7
        %v328 = vsub.s32 0, %v327
        %v329 = vrot.slane %v324, %v328
        %331 = vmatprep.subr.mxu0 0.0
        %332 = vmatpush1.msra.mxu0 %v323
        %333 = vmatprep.subr.mxu0 0.0
        %334 = vmatpush1.msra.mxu0 %v322
        %335 = vmatprep.subr.mxu0 0.0
        %336 = vmatpush1.msra.mxu0 %v321
        %337 = vmatprep.subr.mxu0 0.0
        %338 = vmatpush1.msra.mxu0 %v320
        %339 = vmatprep.subr.mxu0 0.0
        %340 = vmatpush1.msra.mxu0 %v319
        %341 = vmatprep.subr.mxu0 0.0
        %342 = vmatpush1.msra.mxu0 %v318
        %343 = vmatprep.subr.mxu0 0.0
        %344 = vmatpush1.msra.mxu0 %v317
        %345 = vmatprep.subr.mxu0 0.0
        %346 = vmatpush1.msra.mxu0 %v316
        %347 = vmatprep.subr.mxu0 0.0
        %348 = vmatpush1.msra.mxu0 %v315
        %349 = vmatprep.subr.mxu0 0.0
        %350 = vmatpush1.msra.mxu0 %v314
        %351 = vmatprep.subr.mxu0 0.0
        %352 = vmatpush1.msra.mxu0 %v313
        %353 = vmatprep.subr.mxu0 0.0
        %354 = vmatpush1.msra.mxu0 %v312
        %355 = vmatprep.subr.mxu0 0.0
        %356 = vmatpush1.msra.mxu0 %v311
        %357 = vmatprep.subr.mxu0 0.0
        %358 = vmatpush1.msra.mxu0 %v310
        %359 = vmatprep.subr.mxu0 0.0
        %360 = vmatpush1.msra.mxu0 %v309
        %361 = vmatprep.subr.mxu0 0.0
        %362 = vmatpush1.msra.mxu0 %v308
        %363 = vmatprep.subr.mxu0 0.0
        %364 = vmatpush2.msra.mxu0 0.0
        %365 = vmatprep.subr.mxu0 0.0
        %366 = vmatpush2.msra.mxu0 0.0
        %367 = vmatprep.subr.mxu0 0.0
        %368 = vmatpush2.msra.mxu0 0.0
        %369 = vmatprep.subr.mxu0 0.0
        %370 = vmatpush2.msra.mxu0 0.0
        %371 = vmatprep.subr.mxu0 0.0
        %372 = vmatpush2.msra.mxu0 0.0
        %373 = vmatprep.subr.mxu0 0.0
        %374 = vmatpush2.msra.mxu0 0.0
        %375 = vmatprep.subr.mxu0 0.0
        %376 = vmatpush2.msra.mxu0 0.0
        %377 = vmatprep.subr.mxu0 0.0
        %378 = vmatpush2.msra.mxu0 0.0
        %379 = vmatprep.subr.mxu0 0.0
        %380 = vmatpush2.msra.mxu0 0.0
        %381 = vmatprep.subr.mxu0 0.0
        %382 = vmatpush2.msra.mxu0 0.0
        %383 = vmatprep.subr.mxu0 0.0
        %384 = vmatpush2.msra.mxu0 0.0
        %385 = vmatprep.subr.mxu0 0.0
        %386 = vmatpush2.msra.mxu0 0.0
        %387 = vmatprep.subr.mxu0 0.0
        %388 = vmatpush2.msra.mxu0 0.0
        %389 = vmatprep.subr.mxu0 0.0
        %390 = vmatpush2.msra.mxu0 0.0
        %391 = vmatprep.subr.mxu0 0.0
        %392 = vmatpush2.msra.mxu0 0.0
        %393 = vmatprep.subr.mxu0 0.0
        %394 = vmatpush2.msra.mxu0 0.0
        %395 = vmatprep.mubr.f32.mxu0 0.0
        %396 = vmatmul.mubr.f32.gmra.mxu0 %v307
        %v397 = vpop.f32.mrf.mxu0
        %v398 = vadd.f32 %v329, %v397
        %v399 = vpop.f32.mrf.mxu0
        %400 = vdwg.mxu0
        %v401 = vmax.f32 %v398, 0.0
        %402 = vst [vmem:[%s306] sm:$0xff] %v401
        %v403 = vld [vmem:[#allocation7] sm:$0xff]
        %v404 = vld [vmem:[#allocation7 + $0x8] sm:$0xff]
        %v405 = vld [vmem:[#allocation7 + $0x10] sm:$0xff]
        %v406 = vld [vmem:[#allocation7 + $0x18] sm:$0xff]
        %v407 = vld [vmem:[#allocation7 + $0x20] sm:$0xff]
        %v408 = vld [vmem:[#allocation7 + $0x28] sm:$0xff]
        %v409 = vld [vmem:[#allocation7 + $0x30] sm:$0xff]
        %v410 = vld [vmem:[#allocation7 + $0x38] sm:$0xff]
        %v411 = vld [vmem:[#allocation7 + $0x40] sm:$0xff]
        %v412 = vld [vmem:[#allocation7 + $0x48] sm:$0xff]
        %v413 = vld [vmem:[#allocation7 + $0x50] sm:$0xff]
        %v414 = vld [vmem:[#allocation7 + $0x58] sm:$0xff]
        %v415 = vld [vmem:[#allocation7 + $0x60] sm:$0xff]
        %v416 = vld [vmem:[#allocation7 + $0x68] sm:$0xff]
        %v417 = vld [vmem:[#allocation7 + $0x70] sm:$0xff]
        %v418 = vld [vmem:[#allocation7 + $0x78] sm:$0xff]
        %v419 = vld [vmem:[%s4] sm:$0x1]
        %v421 = vlaneseq
        %v422 = vshrl.u32 %v421, 7
        %v423 = vsub.s32 0, %v422
        %v424 = vrot.slane %v419, %v423
        %426 = vmatprep.subr.mxu0 0.0
        %427 = vmatpush1.msra.mxu0 %v418
        %428 = vmatprep.subr.mxu0 0.0
        %429 = vmatpush1.msra.mxu0 %v417
        %430 = vmatprep.subr.mxu0 0.0
        %431 = vmatpush1.msra.mxu0 %v416
        %432 = vmatprep.subr.mxu0 0.0
        %433 = vmatpush1.msra.mxu0 %v415
        %434 = vmatprep.subr.mxu0 0.0
        %435 = vmatpush1.msra.mxu0 %v414
        %436 = vmatprep.subr.mxu0 0.0
        %437 = vmatpush1.msra.mxu0 %v413
        %438 = vmatprep.subr.mxu0 0.0
        %439 = vmatpush1.msra.mxu0 %v412
        %440 = vmatprep.subr.mxu0 0.0
        %441 = vmatpush1.msra.mxu0 %v411
        %442 = vmatprep.subr.mxu0 0.0
        %443 = vmatpush1.msra.mxu0 %v410
        %444 = vmatprep.subr.mxu0 0.0
        %445 = vmatpush1.msra.mxu0 %v409
        %446 = vmatprep.subr.mxu0 0.0
        %447 = vmatpush1.msra.mxu0 %v408
        %448 = vmatprep.subr.mxu0 0.0
        %449 = vmatpush1.msra.mxu0 %v407
        %450 = vmatprep.subr.mxu0 0.0
        %451 = vmatpush1.msra.mxu0 %v406
        %452 = vmatprep.subr.mxu0 0.0
        %453 = vmatpush1.msra.mxu0 %v405
        %454 = vmatprep.subr.mxu0 0.0
        %455 = vmatpush1.msra.mxu0 %v404
        %456 = vmatprep.subr.mxu0 0.0
        %457 = vmatpush1.msra.mxu0 %v403
        %458 = vmatprep.subr.mxu0 0.0
        %459 = vmatpush2.msra.mxu0 0.0
        %460 = vmatprep.subr.mxu0 0.0
        %461 = vmatpush2.msra.mxu0 0.0
        %462 = vmatprep.subr.mxu0 0.0
        %463 = vmatpush2.msra.mxu0 0.0
        %464 = vmatprep.subr.mxu0 0.0
        %465 = vmatpush2.msra.mxu0 0.0
        %466 = vmatprep.subr.mxu0 0.0
        %467 = vmatpush2.msra.mxu0 0.0
        %468 = vmatprep.subr.mxu0 0.0
        %469 = vmatpush2.msra.mxu0 0.0
        %470 = vmatprep.subr.mxu0 0.0
        %471 = vmatpush2.msra.mxu0 0.0
        %472 = vmatprep.subr.mxu0 0.0
        %473 = vmatpush2.msra.mxu0 0.0
        %474 = vmatprep.subr.mxu0 0.0
        %475 = vmatpush2.msra.mxu0 0.0
        %476 = vmatprep.subr.mxu0 0.0
        %477 = vmatpush2.msra.mxu0 0.0
        %478 = vmatprep.subr.mxu0 0.0
        %479 = vmatpush2.msra.mxu0 0.0
        %480 = vmatprep.subr.mxu0 0.0
        %481 = vmatpush2.msra.mxu0 0.0
        %482 = vmatprep.subr.mxu0 0.0
        %483 = vmatpush2.msra.mxu0 0.0
        %484 = vmatprep.subr.mxu0 0.0
        %485 = vmatpush2.msra.mxu0 0.0
        %486 = vmatprep.subr.mxu0 0.0
        %487 = vmatpush2.msra.mxu0 0.0
        %488 = vmatprep.subr.mxu0 0.0
        %489 = vmatpush2.msra.mxu0 0.0
        %490 = vmatprep.mubr.f32.mxu0 0.0
        %491 = vmatmul.mubr.f32.gmra.mxu0 %v401
        %v492 = vpop.f32.mrf.mxu0
        %v493 = vadd.f32 %v424, %v492
        %v494 = vpop.f32.mrf.mxu0
        %495 = vdwg.mxu0
        %496 = vst [vmem:[%s299] sm:$0xff] %v493
        %s497 = sand.u32 %s146, 1
        %s498 = scalar_lea.sflag [#allocation4], %s497
        %s499 = sand.u32 %s146, 1
        %s500 = smul.addr %s499, 8
        %s501 = scalar_lea.vmem [#allocation8], %s500
        %s502 = sand.u32 %s172, 1
        %s503 = scalar_lea.sflag [#allocation10], %s502
        %s504 = sand.u32 %s172, 1
        %s505 = smul.addr %s504, 8
        %s506 = scalar_lea.vmem [#allocation9], %s505
        // Predicated region
        $region53: #{tpu_custom_call.1} parent=39 // pred_check
          %p507 = pneg %p156
        $region54: #{tpu_custom_call.1} parent=39 // pred_check_branch
          %509 = sbr.rel (%p507) target = $region56
        $region55: #{tpu_custom_call.1} parent=39 // pred_region
          %s511 = ssub.s32 128, 128
          %512 = vsyncadd %s498, %s511
          %s513 = smul.addr %s28, 128
          %s514 = scalar_lea.hbm %s5, %s513
          %s516 = sshll.u32 %s501, 4
          %s517 = int_to_ptr.vmem [resolvable:$true] %s516
          %519 = dma.vmem_to_hbm [thread:$0]  %s517, 128, %s514, %s498
        $region56: #{tpu_custom_call.1} parent=39 // pred_fallthru
          _
        // Predicated region
        $region57: #{tpu_custom_call.1} parent=39 // pred_check
          %p520 = pneg %p182
        $region58: #{tpu_custom_call.1} parent=39 // pred_check_branch
          %522 = sbr.rel (%p520) target = $region60
        $region59: #{tpu_custom_call.1} parent=39 // pred_region
          %s524 = ssub.s32 128, 128
          %525 = vsyncadd %s503, %s524
          %s526 = smul.addr %s28, 128
          %s527 = scalar_lea.hbm %s6, %s526
          %s529 = sshll.u32 %s506, 4
          %s530 = int_to_ptr.vmem [resolvable:$true] %s529
          %532 = dma.vmem_to_hbm [thread:$0]  %s530, 128, %s527, %s503
        $region60: #{tpu_custom_call.1} parent=39 // pred_fallthru
          _
      $region40: #{tpu_custom_call.1} parent=5 // pred_fallthru
        _
      %p533 = scmp.le.s32.totalorder 2, %s23
      // Predicated region
      $region61: #{tpu_custom_call.1} parent=5 // pred_check
        %p534 = pneg %p533
      $region62: #{tpu_custom_call.1} parent=5 // pred_check_branch
        %536 = sbr.rel (%p534) target = $region64
      $region63: #{tpu_custom_call.1} parent=5 // pred_region
        %s537 = ssub.s32 %s23, 2
        // Predicated region
        $region65: #{tpu_custom_call.1} parent=63 // pred_check
          %p538 = pneg %p162
        $region66: #{tpu_custom_call.1} parent=63 // pred_check_branch
          %540 = sbr.rel (%p538) target = $region68
        $region67: #{tpu_custom_call.1} parent=63 // pred_region
          %s541 = sand.u32 %s147, 1
          %s542 = scalar_lea.sflag [#allocation4], %s541
          %s543 = sand.u32 %s147, 1
          %s544 = smul.addr %s543, 8
          %s545 = scalar_lea.vmem [#allocation8], %s544
          %546 = dma.done %s542, 128
        $region68: #{tpu_custom_call.1} parent=63 // pred_fallthru
          _
        // Predicated region
        $region69: #{tpu_custom_call.1} parent=63 // pred_check
          %p547 = pneg %p188
        $region70: #{tpu_custom_call.1} parent=63 // pred_check_branch
          %549 = sbr.rel (%p547) target = $region72
        $region71: #{tpu_custom_call.1} parent=63 // pred_region
          %s550 = sand.u32 %s173, 1
          %s551 = scalar_lea.sflag [#allocation10], %s550
          %s552 = sand.u32 %s173, 1
          %s553 = smul.addr %s552, 8
          %s554 = scalar_lea.vmem [#allocation9], %s553
          %555 = dma.done %s551, 128
        $region72: #{tpu_custom_call.1} parent=63 // pred_fallthru
          _
      $region64: #{tpu_custom_call.1} parent=5 // pred_fallthru
        _
    $region6: #{tpu_custom_call.1} parent=1 // loop_footer
      %s27 = sadd.s32 1, %s23
    $region7: #{tpu_custom_call.1} parent=1 // loop_footer_branch
      %22 = sbr.rel target = $region3
    $region8: #{tpu_custom_call.1} parent=1 // loop_exit
      _
    %556 = vsyncpa [#allocation3], 1
    %s557 = scalar_lea.sflag [#allocation3], 1
    %558 = vsyncpa %s557, 1
    %559 = vsyncpa [#allocation6], 1
    %560 = vsyncpa [#allocation4], 1
    %s561 = scalar_lea.sflag [#allocation4], 1
    %562 = vsyncpa %s561, 1
    %563 = vsyncpa [#allocation10], 1
    %s564 = scalar_lea.sflag [#allocation10], 1
    %565 = vsyncpa %s564, 1

</llo_original>
